<compile_context>
chip_gen: v6e
topology: v6e:2x2x1
jax: 0.10.0
libtpu: 0.0.40
codegen_flags: <defaults>
</compile_context>

<pallas_src>
import functools

import jax
import jax.numpy as jnp
from jax.experimental import pallas as pl
from jax.experimental.pallas import tpu as pltpu


# ---------------------------------------------------------------------------
# Shared per-layer LSTM cell math (used by both kernels).
# ---------------------------------------------------------------------------
def _lstm_layer_step(x_bf16, h_prev, c_prev, wx_ref, wh_ref, b_ref, H):
    """One nn.LSTMCell update for a single layer.

    x_bf16 : [B, in_l] bf16   wx_ref : [in_l, 4H] bf16 (W_ih^T)
    h_prev : [B, H]    f32    wh_ref : [H, 4H]    bf16 (W_hh^T)
    c_prev : [B, H]    f32    b_ref  : [1, 4H]    f32  (b_ih + b_hh)
    """
    # Two MXU pushes with f32 accumulation; no concat(x, h) relayout.
    gates = (
        jnp.dot(x_bf16, wx_ref[...], preferred_element_type=jnp.float32)
        + jnp.dot(h_prev.astype(jnp.bfloat16), wh_ref[...],
                  preferred_element_type=jnp.float32)
        + b_ref[...]
    )
    # Two full-width EUP passes instead of four lane-sparse slices.
    sig = jax.nn.sigmoid(gates)
    th = jnp.tanh(gates)
    i_g = sig[:, 0 * H:1 * H]
    f_g = sig[:, 1 * H:2 * H]
    g_g = th[:, 2 * H:3 * H]
    o_g = sig[:, 3 * H:4 * H]
    c_new = f_g * c_prev + i_g * g_g
    h_new = o_g * jnp.tanh(c_new)
    return h_new, c_new


# ---------------------------------------------------------------------------
# Kernel 1: single-step, all layers fused (module's forward()).
# ---------------------------------------------------------------------------
def _make_cell_kernel(num_layers, hidden_size):
    H = hidden_size

    def kernel(*refs):
        # refs = (x, prev_h[L,B,H], prev_c[L,B,H],
        #         wx0, wh0, b0, wx1, wh1, b1, ..., h_out[L,B,H], c_out[L,B,H])
        n_in = 3 + 3 * num_layers
        x_ref, hp_ref, cp_ref = refs[0], refs[1], refs[2]
        w_refs = refs[3:n_in]
        h_out_ref, c_out_ref = refs[n_in], refs[n_in + 1]

        x = x_ref[...].astype(jnp.bfloat16)
        for layer in range(num_layers):
            wx_ref = w_refs[3 * layer + 0]
            wh_ref = w_refs[3 * layer + 1]
            b_ref = w_refs[3 * layer + 2]
            h_new, c_new = _lstm_layer_step(
                x, hp_ref[layer], cp_ref[layer], wx_ref, wh_ref, b_ref, H)
            h_out_ref[layer] = h_new
            c_out_ref[layer] = c_new
            # TODO(synk): inter-layer nn.Dropout is stochastic in training
            # mode; here it is the eval-mode identity.
            x = h_new.astype(jnp.bfloat16)

    return kernel


# ---------------------------------------------------------------------------
# Kernel 2: time-fused recurrence.  Grid = (batch_blocks, T); weights are
# VMEM-resident across all steps (constant index_map); h/c carried in VMEM
# scratch; x_t streamed per step.
# ---------------------------------------------------------------------------
def _make_seq_kernel(num_layers, hidden_size):
    H = hidden_size

    def kernel(*refs):
        n_in = 3 + 3 * num_layers
        x_ref, h0_ref, c0_ref = refs[0], refs[1], refs[2]
        w_refs = refs[3:n_in]
        h_out_ref, c_out_ref = refs[n_in], refs[n_in + 1]
        h_state, c_state = refs[n_in + 2], refs[n_in + 3]

        t = pl.program_id(1)

        @pl.when(t == 0)
        def _():
            h_state[...] = h0_ref[...]
            c_state[...] = c0_ref[...]

        x = x_ref[0].astype(jnp.bfloat16)            # [bb, in]
        for layer in range(num_layers):
            wx_ref = w_refs[3 * layer + 0]
            wh_ref = w_refs[3 * layer + 1]
            b_ref = w_refs[3 * layer + 2]
            h_new, c_new = _lstm_layer_step(
                x, h_state[layer], c_state[layer], wx_ref, wh_ref, b_ref, H)
            h_state[layer] = h_new
            c_state[layer] = c_new
            # TODO(synk): inter-layer nn.Dropout is the eval-mode identity.
            x = h_new.astype(jnp.bfloat16)

        h_out_ref[0] = h_state[...]
        c_out_ref[0] = c_state[...]

    return kernel


# ---------------------------------------------------------------------------
# Wrappers.
# ---------------------------------------------------------------------------
def _vmem_limit_bytes(params, B, H, L, extra_bytes=0):
    """Scoped-VMEM request derived from the actual footprint (v7x-safe cap)."""
    pbytes = 0
    for (wx, wh, b) in params:
        pbytes += wx.size * wx.dtype.itemsize
        pbytes += wh.size * wh.dtype.itemsize
        pbytes += b.size * b.dtype.itemsize
    state_bytes = 4 * L * B * H * 4          # h/c, in + out, f32
    total = 2 * (pbytes + state_bytes + extra_bytes) + (1 << 20)
    return int(min(max(total, 32 * 1024 * 1024), 64 * 1024 * 1024))


def _flatten_params(params):
    flat = []
    for (wx, wh, b) in params:
        flat += [wx, wh, b]
    return flat


def _cell_call(x, prev_h_lbh, prev_c_lbh, params, num_layers, hidden_size):
    """Single fused pallas_call for one cell step (all layers)."""
    B = x.shape[0]
    H = hidden_size
    L = num_layers
    vmem = pl.BlockSpec(memory_space=pltpu.MemorySpace.VMEM)
    n_in = 3 + 3 * L

    return pl.pallas_call(
        _make_cell_kernel(L, H),
        out_shape=(
            jax.ShapeDtypeStruct((L, B, H), jnp.float32),
            jax.ShapeDtypeStruct((L, B, H), jnp.float32),
        ),
        in_specs=[vmem] * n_in,
        out_specs=(vmem, vmem),
        compiler_params=pltpu.CompilerParams(
            vmem_limit_bytes=_vmem_limit_bytes(params, B, H, L)),
    )(x, prev_h_lbh, prev_c_lbh, *_flatten_params(params))


@functools.partial(jax.jit, static_argnums=(3, 4))
def multilayer_lstm_cell_forward(curr_input, prev_states, params,
                                 num_layers, hidden_size):
    """Forward of MultiLayerLSTMCell (one step).

    curr_input:  [B, input_size]
    prev_states: (prev_h [B, L*H], prev_c [B, L*H]) or None
    returns:     (h_all [B, L*H], c_all [B, L*H])
    """
    B = curr_input.shape[0]
    H = hidden_size
    L = num_layers

    if prev_states is None:
        prev_h_lbh = jnp.zeros((L, B, H), jnp.float32)
        prev_c_lbh = jnp.zeros((L, B, H), jnp.float32)
    else:
        prev_h, prev_c = prev_states
        prev_h_lbh = prev_h.reshape(B, L, H).transpose(1, 0, 2)
        prev_c_lbh = prev_c.reshape(B, L, H).transpose(1, 0, 2)

    h_lbh, c_lbh = _cell_call(curr_input, prev_h_lbh, prev_c_lbh,
                              params, L, H)
    h_all = h_lbh.transpose(1, 0, 2).reshape(B, L * H)
    c_all = c_lbh.transpose(1, 0, 2).reshape(B, L * H)
    return h_all, c_all


@functools.partial(jax.jit, static_argnums=(3, 4, 5))
def multilayer_lstm_sequence_forward(x_seq, init_states, params,
                                     num_layers, hidden_size,
                                     batch_block=None):
    """Time-fused recurrence: equivalent to calling the cell once per step.

    x_seq:       [T, B, input_size]
    init_states: (h0 [B, L*H], c0 [B, L*H]) or None
    returns:     (h_seq [T, B, L*H], c_seq [T, B, L*H])  (per-step states)
    """
    T, B, in_dim = x_seq.shape
    H = hidden_size
    L = num_layers
    bb = B if batch_block is None else batch_block
    assert B % bb == 0, "batch_block must divide batch size"
    nb = B // bb

    if init_states is None:
        h0_lbh = jnp.zeros((L, B, H), jnp.float32)
        c0_lbh = jnp.zeros((L, B, H), jnp.float32)
    else:
        h0, c0 = init_states
        h0_lbh = h0.reshape(B, L, H).transpose(1, 0, 2)
        c0_lbh = c0.reshape(B, L, H).transpose(1, 0, 2)

    in_specs = [
        pl.BlockSpec((1, bb, in_dim), lambda b, t: (t, b, 0)),   # x_t streamed
        pl.BlockSpec((L, bb, H), lambda b, t: (0, b, 0)),        # h0 (per b blk)
        pl.BlockSpec((L, bb, H), lambda b, t: (0, b, 0)),        # c0 (per b blk)
    ]
    for (wx, wh, b_) in params:
        # Constant index_map -> weights stay VMEM-resident across all T steps.
        in_specs.append(pl.BlockSpec(wx.shape, lambda b, t: (0, 0)))
        in_specs.append(pl.BlockSpec(wh.shape, lambda b, t: (0, 0)))
        in_specs.append(pl.BlockSpec(b_.shape, lambda b, t: (0, 0)))

    out_specs = (
        pl.BlockSpec((1, L, bb, H), lambda b, t: (t, 0, b, 0)),
        pl.BlockSpec((1, L, bb, H), lambda b, t: (t, 0, b, 0)),
    )

    extra = bb * in_dim * 4 * 4 + 4 * L * bb * H * 4
    h_tlbh, c_tlbh = pl.pallas_call(
        _make_seq_kernel(L, H),
        grid=(nb, T),
        out_shape=(
            jax.ShapeDtypeStruct((T, L, B, H), jnp.float32),
            jax.ShapeDtypeStruct((T, L, B, H), jnp.float32),
        ),
        in_specs=in_specs,
        out_specs=out_specs,
        scratch_shapes=[
            pltpu.VMEM((L, bb, H), jnp.float32),   # carried h
            pltpu.VMEM((L, bb, H), jnp.float32),   # carried c
        ],
        compiler_params=pltpu.CompilerParams(
            dimension_semantics=("parallel", "arbitrary"),
            vmem_limit_bytes=_vmem_limit_bytes(params, bb, H, L,
                                               extra_bytes=extra)),
    )(x_seq, h0_lbh, c0_lbh, *_flatten_params(params))

    h_seq = h_tlbh.transpose(0, 2, 1, 3).reshape(T, B, L * H)
    c_seq = c_tlbh.transpose(0, 2, 1, 3).reshape(T, B, L * H)
    return h_seq, c_seq


# ---------------------------------------------------------------------------
# Params + pure-JAX reference.
# ---------------------------------------------------------------------------
def init_multilayer_lstm_params(key, input_size, hidden_size, num_layers):
    """Deterministic synthetic params matching nn.LSTMCell shapes.

    PyTorch shapes: W_ih [4H, in], W_hh [4H, H], b_ih [4H], b_hh [4H].
    Stored as W_x = W_ih^T [in, 4H] bf16, W_h = W_hh^T [H, 4H] bf16,
    and a summed bias [1, 4H] f32.
    """
    params = []
    in_dim = input_size
    for _ in range(num_layers):
        key, k1, k2, k3, k4 = jax.random.split(key, 5)
        w_ih = jax.random.normal(k1, (4 * hidden_size, in_dim), jnp.float32) * 0.1
        w_hh = jax.random.normal(k2, (4 * hidden_size, hidden_size), jnp.float32) * 0.1
        b_ih = jax.random.normal(k3, (4 * hidden_size,), jnp.float32) * 0.1
        b_hh = jax.random.normal(k4, (4 * hidden_size,), jnp.float32) * 0.1
        wx = w_ih.T.astype(jnp.bfloat16)
        wh = w_hh.T.astype(jnp.bfloat16)
        b = (b_ih + b_hh)[None, :].astype(jnp.float32)
        params.append((wx, wh, b))
        in_dim = hidden_size
    return tuple(params)


def _reference_cell_forward(x, prev_states, params, num_layers, hidden_size):
    """Pure-JAX reference (same bf16-matmul / f32-elementwise recipe)."""
    B = x.shape[0]
    H = hidden_size
    L = num_layers
    prev_h, prev_c = prev_states
    ph = prev_h.reshape(B, L, H).transpose(1, 0, 2)
    pc = prev_c.reshape(B, L, H).transpose(1, 0, 2)
    h_out, c_out = [], []
    xi = x
    for layer in range(L):
        wx, wh, b = params[layer]
        gates = (jnp.dot(xi.astype(jnp.bfloat16), wx,
                         preferred_element_type=jnp.float32)
                 + jnp.dot(ph[layer].astype(jnp.bfloat16), wh,
                           preferred_element_type=jnp.float32)
                 + b)
        i_g = jax.nn.sigmoid(gates[:, 0 * H:1 * H])
        f_g = jax.nn.sigmoid(gates[:, 1 * H:2 * H])
        g_g = jnp.tanh(gates[:, 2 * H:3 * H])
        o_g = jax.nn.sigmoid(gates[:, 3 * H:4 * H])
        c_new = f_g * pc[layer] + i_g * g_g
        h_new = o_g * jnp.tanh(c_new)
        h_out.append(h_new)
        c_out.append(c_new)
        xi = h_new
    return jnp.concatenate(h_out, axis=-1), jnp.concatenate(c_out, axis=-1)


# ---------------------------------------------------------------------------
# Demo / correctness check.
# ---------------------------------------------------------------------------
if __name__ == "__main__":
    B = 8
    INPUT_SIZE = 32
    HIDDEN = 32
    NUM_LAYERS = 2
    T = 6

    key = jax.random.PRNGKey(0)
    key, kx, kh, kc, kp, ks = jax.random.split(key, 6)

    x = jax.random.normal(kx, (B, INPUT_SIZE), jnp.float32)
    prev_h = jax.random.normal(kh, (B, NUM_LAYERS * HIDDEN), jnp.float32)
    prev_c = jax.random.normal(kc, (B, NUM_LAYERS * HIDDEN), jnp.float32)
    x_seq = jax.random.normal(ks, (T, B, INPUT_SIZE), jnp.float32)

    params = init_multilayer_lstm_params(kp, INPUT_SIZE, HIDDEN, NUM_LAYERS)

    # --- single-step forward vs reference ---------------------------------
    h_all, c_all = multilayer_lstm_cell_forward(
        x, (prev_h, prev_c), params, NUM_LAYERS, HIDDEN)
    jax.block_until_ready((h_all, c_all))
    h_ref, c_ref = _reference_cell_forward(
        x, (prev_h, prev_c), params, NUM_LAYERS, HIDDEN)
    assert jnp.allclose(h_all, h_ref, atol=2e-3, rtol=2e-3), "h mismatch"
    assert jnp.allclose(c_all, c_ref, atol=2e-3, rtol=2e-3), "c mismatch"

    # --- prev_states=None path --------------------------------------------
    h0, c0 = multilayer_lstm_cell_forward(x, None, params, NUM_LAYERS, HIDDEN)
    jax.block_until_ready((h0, c0))
    zeros = jnp.zeros_like(prev_h)
    h0_ref, c0_ref = _reference_cell_forward(
        x, (zeros, zeros), params, NUM_LAYERS, HIDDEN)
    assert jnp.allclose(h0, h0_ref, atol=2e-3, rtol=2e-3), "h0 mismatch"
    assert jnp.allclose(c0, c0_ref, atol=2e-3, rtol=2e-3), "c0 mismatch"

    # --- time-fused sequence kernel vs stepping the reference -------------
    h_seq, c_seq = multilayer_lstm_sequence_forward(
        x_seq, (prev_h, prev_c), params, NUM_LAYERS, HIDDEN)
    jax.block_until_ready((h_seq, c_seq))

    h_t, c_t = prev_h, prev_c
    hs, cs = [], []
    for t in range(T):
        h_t, c_t = _reference_cell_forward(
            x_seq[t], (h_t, c_t), params, NUM_LAYERS, HIDDEN)
        hs.append(h_t)
        cs.append(c_t)
    h_seq_ref = jnp.stack(hs)
    c_seq_ref = jnp.stack(cs)
    assert jnp.allclose(h_seq, h_seq_ref, atol=2e-3, rtol=2e-3), "h_seq mismatch"
    assert jnp.allclose(c_seq, c_seq_ref, atol=2e-3, rtol=2e-3), "c_seq mismatch"

    print("KERNEL_OK")
</pallas_src>

<mosaic_0001>
module attributes {stable_mosaic.version = 11 : i64} {
  func.func @kernel(%arg0: memref<8x32xf32, #tpu.memory_space<vmem>>, %arg1: memref<2x8x32xf32, #tpu.memory_space<vmem>>, %arg2: memref<2x8x32xf32, #tpu.memory_space<vmem>>, %arg3: memref<32x128xbf16, #tpu.memory_space<vmem>>, %arg4: memref<32x128xbf16, #tpu.memory_space<vmem>>, %arg5: memref<1x128xf32, #tpu.memory_space<vmem>>, %arg6: memref<32x128xbf16, #tpu.memory_space<vmem>>, %arg7: memref<32x128xbf16, #tpu.memory_space<vmem>>, %arg8: memref<1x128xf32, #tpu.memory_space<vmem>>, %arg9: memref<2x8x32xf32, #tpu.memory_space<vmem>>, %arg10: memref<2x8x32xf32, #tpu.memory_space<vmem>>) attributes {dimension_semantics = [], scalar_prefetch = 0 : i64, scratch_operands = 0 : i64, tpu.core_type = #tpu.core_type<tc>} {
    %c0 = arith.constant 0 : index
    %c0_0 = arith.constant 0 : index
    %0 = vector.load %arg0[%c0, %c0_0] : memref<8x32xf32, #tpu.memory_space<vmem>>, vector<8x32xf32>
    %1 = arith.truncf %0 : vector<8x32xf32> to vector<8x32xbf16>
    %c0_1 = arith.constant 0 : index
    %c0_2 = arith.constant 0 : index
    %c0_3 = arith.constant 0 : index
    %2 = vector.load %arg1[%c0_1, %c0_2, %c0_3] : memref<2x8x32xf32, #tpu.memory_space<vmem>>, vector<1x8x32xf32>
    %3 = vector.shape_cast %2 : vector<1x8x32xf32> to vector<8x32xf32>
    %c0_4 = arith.constant 0 : index
    %c0_5 = arith.constant 0 : index
    %c0_6 = arith.constant 0 : index
    %4 = vector.load %arg2[%c0_4, %c0_5, %c0_6] : memref<2x8x32xf32, #tpu.memory_space<vmem>>, vector<1x8x32xf32>
    %5 = vector.shape_cast %4 : vector<1x8x32xf32> to vector<8x32xf32>
    %c0_7 = arith.constant 0 : index
    %c0_8 = arith.constant 0 : index
    %6 = vector.load %arg3[%c0_7, %c0_8] : memref<32x128xbf16, #tpu.memory_space<vmem>>, vector<32x128xbf16>
    %cst = arith.constant dense<0.000000e+00> : vector<8x128xf32>
    %7 = tpu.matmul %1, %6, %cst {dimension_numbers = #tpu.dot_dimension_numbers<[1], [0], [0], [1], [0, 0, 1, 1], [], []>} : vector<8x32xbf16>, vector<32x128xbf16>, vector<8x128xf32> -> vector<8x128xf32>
    %8 = arith.truncf %3 : vector<8x32xf32> to vector<8x32xbf16>
    %c0_9 = arith.constant 0 : index
    %c0_10 = arith.constant 0 : index
    %9 = vector.load %arg4[%c0_9, %c0_10] : memref<32x128xbf16, #tpu.memory_space<vmem>>, vector<32x128xbf16>
    %cst_11 = arith.constant dense<0.000000e+00> : vector<8x128xf32>
    %10 = tpu.matmul %8, %9, %cst_11 {dimension_numbers = #tpu.dot_dimension_numbers<[1], [0], [0], [1], [0, 0, 1, 1], [], []>} : vector<8x32xbf16>, vector<32x128xbf16>, vector<8x128xf32> -> vector<8x128xf32>
    %11 = arith.addf %7, %10 : vector<8x128xf32>
    %c0_12 = arith.constant 0 : index
    %c0_13 = arith.constant 0 : index
    %12 = vector.load %arg5[%c0_12, %c0_13] : memref<1x128xf32, #tpu.memory_space<vmem>>, vector<1x128xf32>
    %13 = vector.broadcast %12 : vector<1x128xf32> to vector<8x128xf32>
    %14 = arith.addf %11, %13 : vector<8x128xf32>
    %15 = arith.negf %14 : vector<8x128xf32>
    %16 = math.exp %15 : vector<8x128xf32>
    %cst_14 = arith.constant 1.000000e+00 : f32
    %17 = vector.broadcast %cst_14 : f32 to vector<8x128xf32>
    %18 = arith.addf %17, %16 : vector<8x128xf32>
    %19 = arith.divf %17, %18 : vector<8x128xf32>
    %20 = math.tanh %14 : vector<8x128xf32>
    %21 = vector.extract_strided_slice %19 {offsets = [0, 0], sizes = [8, 32], strides = [1, 1]} : vector<8x128xf32> to vector<8x32xf32>
    %22 = vector.extract_strided_slice %19 {offsets = [0, 32], sizes = [8, 32], strides = [1, 1]} : vector<8x128xf32> to vector<8x32xf32>
    %23 = vector.extract_strided_slice %20 {offsets = [0, 64], sizes = [8, 32], strides = [1, 1]} : vector<8x128xf32> to vector<8x32xf32>
    %24 = vector.extract_strided_slice %19 {offsets = [0, 96], sizes = [8, 32], strides = [1, 1]} : vector<8x128xf32> to vector<8x32xf32>
    %25 = arith.mulf %22, %5 : vector<8x32xf32>
    %26 = arith.mulf %21, %23 : vector<8x32xf32>
    %27 = arith.addf %25, %26 : vector<8x32xf32>
    %28 = math.tanh %27 : vector<8x32xf32>
    %29 = arith.mulf %24, %28 : vector<8x32xf32>
    %c0_15 = arith.constant 0 : index
    %c0_16 = arith.constant 0 : index
    %c0_17 = arith.constant 0 : index
    %30 = vector.load %arg9[%c0_15, %c0_16, %c0_17] : memref<2x8x32xf32, #tpu.memory_space<vmem>>, vector<1x8x32xf32>
    %31 = vector.shape_cast %30 : vector<1x8x32xf32> to vector<8x32xf32>
    %32 = vector.shape_cast %29 : vector<8x32xf32> to vector<1x8x32xf32>
    tpu.vector_store %arg9[%c0_15, %c0_16, %c0_17], %32 {strides = array<i32>} : memref<2x8x32xf32, #tpu.memory_space<vmem>>, vector<1x8x32xf32>,
    %c0_18 = arith.constant 0 : index
    %c0_19 = arith.constant 0 : index
    %c0_20 = arith.constant 0 : index
    %33 = vector.load %arg10[%c0_18, %c0_19, %c0_20] : memref<2x8x32xf32, #tpu.memory_space<vmem>>, vector<1x8x32xf32>
    %34 = vector.shape_cast %33 : vector<1x8x32xf32> to vector<8x32xf32>
    %35 = vector.shape_cast %27 : vector<8x32xf32> to vector<1x8x32xf32>
    tpu.vector_store %arg10[%c0_18, %c0_19, %c0_20], %35 {strides = array<i32>} : memref<2x8x32xf32, #tpu.memory_space<vmem>>, vector<1x8x32xf32>,
    %36 = arith.truncf %29 : vector<8x32xf32> to vector<8x32xbf16>
    %c1 = arith.constant 1 : index
    %c0_21 = arith.constant 0 : index
    %c0_22 = arith.constant 0 : index
    %37 = vector.load %arg1[%c1, %c0_21, %c0_22] : memref<2x8x32xf32, #tpu.memory_space<vmem>>, vector<1x8x32xf32>
    %38 = vector.shape_cast %37 : vector<1x8x32xf32> to vector<8x32xf32>
    %c1_23 = arith.constant 1 : index
    %c0_24 = arith.constant 0 : index
    %c0_25 = arith.constant 0 : index
    %39 = vector.load %arg2[%c1_23, %c0_24, %c0_25] : memref<2x8x32xf32, #tpu.memory_space<vmem>>, vector<1x8x32xf32>
    %40 = vector.shape_cast %39 : vector<1x8x32xf32> to vector<8x32xf32>
    %c0_26 = arith.constant 0 : index
    %c0_27 = arith.constant 0 : index
    %41 = vector.load %arg6[%c0_26, %c0_27] : memref<32x128xbf16, #tpu.memory_space<vmem>>, vector<32x128xbf16>
    %cst_28 = arith.constant dense<0.000000e+00> : vector<8x128xf32>
    %42 = tpu.matmul %36, %41, %cst_28 {dimension_numbers = #tpu.dot_dimension_numbers<[1], [0], [0], [1], [0, 0, 1, 1], [], []>} : vector<8x32xbf16>, vector<32x128xbf16>, vector<8x128xf32> -> vector<8x128xf32>
    %43 = arith.truncf %38 : vector<8x32xf32> to vector<8x32xbf16>
    %c0_29 = arith.constant 0 : index
    %c0_30 = arith.constant 0 : index
    %44 = vector.load %arg7[%c0_29, %c0_30] : memref<32x128xbf16, #tpu.memory_space<vmem>>, vector<32x128xbf16>
    %cst_31 = arith.constant dense<0.000000e+00> : vector<8x128xf32>
    %45 = tpu.matmul %43, %44, %cst_31 {dimension_numbers = #tpu.dot_dimension_numbers<[1], [0], [0], [1], [0, 0, 1, 1], [], []>} : vector<8x32xbf16>, vector<32x128xbf16>, vector<8x128xf32> -> vector<8x128xf32>
    %46 = arith.addf %42, %45 : vector<8x128xf32>
    %c0_32 = arith.constant 0 : index
    %c0_33 = arith.constant 0 : index
    %47 = vector.load %arg8[%c0_32, %c0_33] : memref<1x128xf32, #tpu.memory_space<vmem>>, vector<1x128xf32>
    %48 = vector.broadcast %47 : vector<1x128xf32> to vector<8x128xf32>
    %49 = arith.addf %46, %48 : vector<8x128xf32>
    %50 = arith.negf %49 : vector<8x128xf32>
    %51 = math.exp %50 : vector<8x128xf32>
    %cst_34 = arith.constant 1.000000e+00 : f32
    %52 = vector.broadcast %cst_34 : f32 to vector<8x128xf32>
    %53 = arith.addf %52, %51 : vector<8x128xf32>
    %54 = arith.divf %52, %53 : vector<8x128xf32>
    %55 = math.tanh %49 : vector<8x128xf32>
    %56 = vector.extract_strided_slice %54 {offsets = [0, 0], sizes = [8, 32], strides = [1, 1]} : vector<8x128xf32> to vector<8x32xf32>
    %57 = vector.extract_strided_slice %54 {offsets = [0, 32], sizes = [8, 32], strides = [1, 1]} : vector<8x128xf32> to vector<8x32xf32>
    %58 = vector.extract_strided_slice %55 {offsets = [0, 64], sizes = [8, 32], strides = [1, 1]} : vector<8x128xf32> to vector<8x32xf32>
    %59 = vector.extract_strided_slice %54 {offsets = [0, 96], sizes = [8, 32], strides = [1, 1]} : vector<8x128xf32> to vector<8x32xf32>
    %60 = arith.mulf %57, %40 : vector<8x32xf32>
    %61 = arith.mulf %56, %58 : vector<8x32xf32>
    %62 = arith.addf %60, %61 : vector<8x32xf32>
    %63 = math.tanh %62 : vector<8x32xf32>
    %64 = arith.mulf %59, %63 : vector<8x32xf32>
    %c1_35 = arith.constant 1 : index
    %c0_36 = arith.constant 0 : index
    %c0_37 = arith.constant 0 : index
    %65 = vector.load %arg9[%c1_35, %c0_36, %c0_37] : memref<2x8x32xf32, #tpu.memory_space<vmem>>, vector<1x8x32xf32>
    %66 = vector.shape_cast %65 : vector<1x8x32xf32> to vector<8x32xf32>
    %67 = vector.shape_cast %64 : vector<8x32xf32> to vector<1x8x32xf32>
    tpu.vector_store %arg9[%c1_35, %c0_36, %c0_37], %67 {strides = array<i32>} : memref<2x8x32xf32, #tpu.memory_space<vmem>>, vector<1x8x32xf32>,
    %c1_38 = arith.constant 1 : index
    %c0_39 = arith.constant 0 : index
    %c0_40 = arith.constant 0 : index
    %68 = vector.load %arg10[%c1_38, %c0_39, %c0_40] : memref<2x8x32xf32, #tpu.memory_space<vmem>>, vector<1x8x32xf32>
    %69 = vector.shape_cast %68 : vector<1x8x32xf32> to vector<8x32xf32>
    %70 = vector.shape_cast %62 : vector<8x32xf32> to vector<1x8x32xf32>
    tpu.vector_store %arg10[%c1_38, %c0_39, %c0_40], %70 {strides = array<i32>} : memref<2x8x32xf32, #tpu.memory_space<vmem>>, vector<1x8x32xf32>,
    return
  }
}

</mosaic_0001>

<llo_original>
// kernel: multilayer_lstm_cell_forward.1
$region0: #{multilayer_lstm_cell_forward.1}
  #allocation0 [shape = 'u32[]', space=smem, size = 0x4, offset = 0x4, fixed_abs, tag = 'smem constant byte address 0x4 - core index']
  #allocation1 [shape = 'u32[144,128]{1,0:T(1,128)}', space=vmem, size = 0x12000, scoped, tag = 'internal scratch']
  %s0 = inlined_call_operand.vmem [shape: f32[8,32], index: 0, kind: input, shape index: {}]
  %s1 = inlined_call_operand.vmem [shape: f32[2,8,32], index: 1, kind: input, shape index: {}]
  %s2 = inlined_call_operand.vmem [shape: f32[2,8,32], index: 2, kind: input, shape index: {}]
  %s3 = inlined_call_operand.vmem [shape: bf16[32,128], index: 3, kind: input, shape index: {}]
  %s4 = inlined_call_operand.vmem [shape: bf16[32,128], index: 4, kind: input, shape index: {}]
  %s5 = inlined_call_operand.vmem [shape: f32[1,128], index: 5, kind: input, shape index: {}]
  %s6 = inlined_call_operand.vmem [shape: bf16[32,128], index: 6, kind: input, shape index: {}]
  %s7 = inlined_call_operand.vmem [shape: bf16[32,128], index: 7, kind: input, shape index: {}]
  %s8 = inlined_call_operand.vmem [shape: f32[1,128], index: 8, kind: input, shape index: {}]
  %s9 = inlined_call_operand.vmem [shape: f32[2,8,32], index: 9, kind: output, shape index: {0}]
  %s10 = inlined_call_operand.vmem [shape: f32[2,8,32], index: 10, kind: output, shape index: {1}]
  %11 = xla_tuple %s9, %s10
  %s12 = sld [smem:[#allocation0]]
  $region54: #{multilayer_lstm_cell_forward.1} parent=0
    _
  %s14 = ssub.s32 1, %s12
  %s15 = scalar_select 0, %s14, %s12
  // Predicated region
  $region2: #{multilayer_lstm_cell_forward.1} parent=0 // pred_check
    _
  $region3: #{multilayer_lstm_cell_forward.1} parent=0 // pred_check_branch
    %17 = sbr.rel (0) target = $region5
  $region4: #{multilayer_lstm_cell_forward.1} parent=0 // pred_region
    _
  $region5: #{multilayer_lstm_cell_forward.1} parent=0 // pred_fallthru
    _
  // Predicated region
  $region6: #{multilayer_lstm_cell_forward.1} parent=0 // pred_check
    _
  $region7: #{multilayer_lstm_cell_forward.1} parent=0 // pred_check_branch
    %19 = sbr.rel (0) target = $region9
  $region8: #{multilayer_lstm_cell_forward.1} parent=0 // pred_region
    _
  $region9: #{multilayer_lstm_cell_forward.1} parent=0 // pred_fallthru
    _
  // Predicated region
  $region10: #{multilayer_lstm_cell_forward.1} parent=0 // pred_check
    _
  $region11: #{multilayer_lstm_cell_forward.1} parent=0 // pred_check_branch
    %21 = sbr.rel (0) target = $region13
  $region12: #{multilayer_lstm_cell_forward.1} parent=0 // pred_region
    _
  $region13: #{multilayer_lstm_cell_forward.1} parent=0 // pred_fallthru
    _
  // Predicated region
  $region14: #{multilayer_lstm_cell_forward.1} parent=0 // pred_check
    _
  $region15: #{multilayer_lstm_cell_forward.1} parent=0 // pred_check_branch
    %23 = sbr.rel (0) target = $region17
  $region16: #{multilayer_lstm_cell_forward.1} parent=0 // pred_region
    _
  $region17: #{multilayer_lstm_cell_forward.1} parent=0 // pred_fallthru
    _
  // Predicated region
  $region18: #{multilayer_lstm_cell_forward.1} parent=0 // pred_check
    _
  $region19: #{multilayer_lstm_cell_forward.1} parent=0 // pred_check_branch
    %25 = sbr.rel (0) target = $region21
  $region20: #{multilayer_lstm_cell_forward.1} parent=0 // pred_region
    _
  $region21: #{multilayer_lstm_cell_forward.1} parent=0 // pred_fallthru
    _
  // Predicated region
  $region22: #{multilayer_lstm_cell_forward.1} parent=0 // pred_check
    _
  $region23: #{multilayer_lstm_cell_forward.1} parent=0 // pred_check_branch
    %27 = sbr.rel (0) target = $region25
  $region24: #{multilayer_lstm_cell_forward.1} parent=0 // pred_region
    _
  $region25: #{multilayer_lstm_cell_forward.1} parent=0 // pred_fallthru
    _
  // Predicated region
  $region26: #{multilayer_lstm_cell_forward.1} parent=0 // pred_check
    _
  $region27: #{multilayer_lstm_cell_forward.1} parent=0 // pred_check_branch
    %29 = sbr.rel (0) target = $region29
  $region28: #{multilayer_lstm_cell_forward.1} parent=0 // pred_region
    _
  $region29: #{multilayer_lstm_cell_forward.1} parent=0 // pred_fallthru
    _
  // Predicated region
  $region30: #{multilayer_lstm_cell_forward.1} parent=0 // pred_check
    _
  $region31: #{multilayer_lstm_cell_forward.1} parent=0 // pred_check_branch
    %31 = sbr.rel (0) target = $region33
  $region32: #{multilayer_lstm_cell_forward.1} parent=0 // pred_region
    _
  $region33: #{multilayer_lstm_cell_forward.1} parent=0 // pred_fallthru
    _
  // Predicated region
  $region34: #{multilayer_lstm_cell_forward.1} parent=0 // pred_check
    _
  $region35: #{multilayer_lstm_cell_forward.1} parent=0 // pred_check_branch
    %33 = sbr.rel (0) target = $region37
  $region36: #{multilayer_lstm_cell_forward.1} parent=0 // pred_region
    _
  $region37: #{multilayer_lstm_cell_forward.1} parent=0 // pred_fallthru
    _
  %v35 = vld [vmem:[%s0] sm:$0xff]
  %v36 = vpack.c.bf16 %v35, %v35
  %v37 = vld [vmem:[%s1] sm:$0xff]
  %v38 = vld [vmem:[%s2] sm:$0xff]
  %v39 = vld [vmem:[%s3] sm:$0xf]
  %v40 = vld [vmem:[%s3 + $0x4] sm:$0xf]
  %v41 = vld [vmem:[%s3 + $0x8] sm:$0xf]
  %v42 = vld [vmem:[%s3 + $0xc] sm:$0xf]
  %v43 = vpack.c.bf16 %v37, %v37
  %v44 = vld [vmem:[%s4] sm:$0xf]
  %v45 = vld [vmem:[%s4 + $0x4] sm:$0xf]
  %v46 = vld [vmem:[%s4 + $0x8] sm:$0xf]
  %v47 = vld [vmem:[%s4 + $0xc] sm:$0xf]
  %v52 = vunpack.c.l.b16 %v44
  %v53 = vunpack.c.l.b16 %v45
  %v54 = vunpack.c.l.b16 %v46
  %v55 = vunpack.c.l.b16 %v47
  %v56 = vpack.c.b16 %v53, %v52
  %v57 = vpack.c.b16 %v55, %v54
  %vm60 = vcmask 261120
  %v62 = vsel %vm60, %v43, 0
  %64 = vmatprep.subr.bf16.mxu0 0
  %65 = vmatpush1.bf16.msra.mxu0 0
  %66 = vmatprep.subr.bf16.mxu0 0
  %67 = vmatpush1.bf16.msra.mxu0 0
  %68 = vmatprep.subr.bf16.mxu0 0
  %69 = vmatpush1.bf16.msra.mxu0 0
  %70 = vmatprep.subr.bf16.mxu0 0
  %71 = vmatpush1.bf16.msra.mxu0 0
  %72 = vmatprep.subr.bf16.mxu0 0
  %73 = vmatpush1.bf16.msra.mxu0 0
  %74 = vmatprep.subr.bf16.mxu0 0
  %75 = vmatpush1.bf16.msra.mxu0 0
  %76 = vmatprep.subr.bf16.mxu0 0
  %77 = vmatpush1.bf16.msra.mxu0 %v57
  %78 = vmatprep.subr.bf16.mxu0 0
  %79 = vmatpush1.bf16.msra.mxu0 %v56
  %80 = vmatprep.subr.bf16.mxu0 0
  %81 = vmatpush2.bf16.msra.mxu0 0
  %82 = vmatprep.subr.bf16.mxu0 0
  %83 = vmatpush2.bf16.msra.mxu0 0
  %84 = vmatprep.subr.bf16.mxu0 0
  %85 = vmatpush2.bf16.msra.mxu0 0
  %86 = vmatprep.subr.bf16.mxu0 0
  %87 = vmatpush2.bf16.msra.mxu0 0
  %88 = vmatprep.subr.bf16.mxu0 0
  %89 = vmatpush2.bf16.msra.mxu0 0
  %90 = vmatprep.subr.bf16.mxu0 0
  %91 = vmatpush2.bf16.msra.mxu0 0
  %92 = vmatprep.subr.bf16.mxu0 0
  %93 = vmatpush2.bf16.msra.mxu0 0
  %94 = vmatprep.subr.bf16.mxu0 0
  %95 = vmatpush2.bf16.msra.mxu0 0
  %96 = vmatprep.mubr.bf16.mxu0 0
  %97 = vmatmul.mubr.bf16.gmra.mxu0 %v62
  %v98 = vpop.f32.mrf.mxu0
  %v99 = vadd.f32 0.0, %v98
  %v100 = vpop.f32.mrf.mxu0
  %v101 = vpop.f32.mrf.mxu0
  %v102 = vpop.f32.mrf.mxu0
  %103 = vdwg.mxu0
  %v108 = vunpack.c.l.b16 %v39
  %v109 = vunpack.c.l.b16 %v40
  %v110 = vunpack.c.l.b16 %v41
  %v111 = vunpack.c.l.b16 %v42
  %v112 = vpack.c.b16 %v109, %v108
  %v113 = vpack.c.b16 %v111, %v110
  %v117 = vsel %vm60, %v36, 0
  %119 = vmatprep.subr.bf16.mxu0 0
  %120 = vmatpush1.bf16.msra.mxu0 0
  %121 = vmatprep.subr.bf16.mxu0 0
  %122 = vmatpush1.bf16.msra.mxu0 0
  %123 = vmatprep.subr.bf16.mxu0 0
  %124 = vmatpush1.bf16.msra.mxu0 0
  %125 = vmatprep.subr.bf16.mxu0 0
  %126 = vmatpush1.bf16.msra.mxu0 0
  %127 = vmatprep.subr.bf16.mxu0 0
  %128 = vmatpush1.bf16.msra.mxu0 0
  %129 = vmatprep.subr.bf16.mxu0 0
  %130 = vmatpush1.bf16.msra.mxu0 0
  %131 = vmatprep.subr.bf16.mxu0 0
  %132 = vmatpush1.bf16.msra.mxu0 %v113
  %133 = vmatprep.subr.bf16.mxu0 0
  %134 = vmatpush1.bf16.msra.mxu0 %v112
  %135 = vmatprep.subr.bf16.mxu0 0
  %136 = vmatpush2.bf16.msra.mxu0 0
  %137 = vmatprep.subr.bf16.mxu0 0
  %138 = vmatpush2.bf16.msra.mxu0 0
  %139 = vmatprep.subr.bf16.mxu0 0
  %140 = vmatpush2.bf16.msra.mxu0 0
  %141 = vmatprep.subr.bf16.mxu0 0
  %142 = vmatpush2.bf16.msra.mxu0 0
  %143 = vmatprep.subr.bf16.mxu0 0
  %144 = vmatpush2.bf16.msra.mxu0 0
  %145 = vmatprep.subr.bf16.mxu0 0
  %146 = vmatpush2.bf16.msra.mxu0 0
  %147 = vmatprep.subr.bf16.mxu0 0
  %148 = vmatpush2.bf16.msra.mxu0 0
  %149 = vmatprep.subr.bf16.mxu0 0
  %150 = vmatpush2.bf16.msra.mxu0 0
  %151 = vmatprep.mubr.bf16.mxu0 0
  %152 = vmatmul.mubr.bf16.gmra.mxu0 %v117
  %v153 = vpop.f32.mrf.mxu0
  %v154 = vadd.f32 %v99, %v153
  %v155 = vpop.f32.mrf.mxu0
  %v156 = vpop.f32.mrf.mxu0
  %v157 = vpop.f32.mrf.mxu0
  %158 = vdwg.mxu0
  %v159 = vld [vmem:[%s5] sm:$0x1]
  %v161 = vlaneseq
  %v162 = vshrl.u32 %v161, 7
  %v163 = vsub.s32 0, %v162
  %v164 = vrot.slane %v159, %v163
  %v166 = vadd.f32 %v154, %v164
  %v167 = vxor.u32 %v166, 2147483648
  %v168 = vmul.f32 %v167, 1.442695
  %v169 = vpow.pop %v168
  %v170 = vadd.f32 %v169, 1.0
  %v171 = vrcp.pop %v170
  %v172 = vmul.f32 1.0, %v171
  %v173 = vtanh.pop %v166
  %175 = vrot.lane.b32.xlu0 %v38, 32
  %v176 = vpop.permute.xlu0 %175
  %v178 = vmul.f32 %v172, %v176
  %180 = vrot.lane.b32.xlu0 %v173, 64
  %v181 = vpop.permute.xlu0 %180
  %v183 = vmul.f32 %v172, %v181
  %185 = vrot.lane.b32.xlu0 %v183, 32
  %v186 = vpop.permute.xlu0 %185
  %v188 = vadd.f32 %v178, %v186
  %v189 = vtanh.pop %v188
  %191 = vrot.lane.b32.xlu0 %v189, 64
  %v192 = vpop.permute.xlu0 %191
  %v194 = vmul.f32 %v172, %v192
  %196 = vrot.lane.b32.xlu0 %v194, 32
  %v197 = vpop.permute.xlu0 %196
  %199 = vst.msk [vmem:[%s9] sm:$0xff] %vm60, %v197
  %201 = vrot.lane.b32.xlu0 %v188, 96
  %v202 = vpop.permute.xlu0 %201
  %204 = vst.msk [vmem:[%s10] sm:$0xff] %vm60, %v202
  %v205 = vpack.c.bf16 %v194, %v194
  %s206 = scalar_lea.vmem %s1, 8
  %v207 = vld [vmem:[%s206] sm:$0xff]
  %s208 = scalar_lea.vmem %s2, 8
  %v209 = vld [vmem:[%s208] sm:$0xff]
  %v210 = vld [vmem:[%s6] sm:$0xf]
  %v211 = vld [vmem:[%s6 + $0x4] sm:$0xf]
  %v212 = vld [vmem:[%s6 + $0x8] sm:$0xf]
  %v213 = vld [vmem:[%s6 + $0xc] sm:$0xf]
  %v214 = vpack.c.bf16 %v207, %v207
  %v215 = vld [vmem:[%s7] sm:$0xf]
  %v216 = vld [vmem:[%s7 + $0x4] sm:$0xf]
  %v217 = vld [vmem:[%s7 + $0x8] sm:$0xf]
  %v218 = vld [vmem:[%s7 + $0xc] sm:$0xf]
  %v223 = vunpack.c.l.b16 %v215
  %v224 = vunpack.c.l.b16 %v216
  %v225 = vunpack.c.l.b16 %v217
  %v226 = vunpack.c.l.b16 %v218
  %v227 = vpack.c.b16 %v224, %v223
  %v228 = vpack.c.b16 %v226, %v225
  %v232 = vsel %vm60, %v214, 0
  %234 = vmatprep.subr.bf16.mxu0 0
  %235 = vmatpush1.bf16.msra.mxu0 0
  %236 = vmatprep.subr.bf16.mxu0 0
  %237 = vmatpush1.bf16.msra.mxu0 0
  %238 = vmatprep.subr.bf16.mxu0 0
  %239 = vmatpush1.bf16.msra.mxu0 0
  %240 = vmatprep.subr.bf16.mxu0 0
  %241 = vmatpush1.bf16.msra.mxu0 0
  %242 = vmatprep.subr.bf16.mxu0 0
  %243 = vmatpush1.bf16.msra.mxu0 0
  %244 = vmatprep.subr.bf16.mxu0 0
  %245 = vmatpush1.bf16.msra.mxu0 0
  %246 = vmatprep.subr.bf16.mxu0 0
  %247 = vmatpush1.bf16.msra.mxu0 %v228
  %248 = vmatprep.subr.bf16.mxu0 0
  %249 = vmatpush1.bf16.msra.mxu0 %v227
  %250 = vmatprep.subr.bf16.mxu0 0
  %251 = vmatpush2.bf16.msra.mxu0 0
  %252 = vmatprep.subr.bf16.mxu0 0
  %253 = vmatpush2.bf16.msra.mxu0 0
  %254 = vmatprep.subr.bf16.mxu0 0
  %255 = vmatpush2.bf16.msra.mxu0 0
  %256 = vmatprep.subr.bf16.mxu0 0
  %257 = vmatpush2.bf16.msra.mxu0 0
  %258 = vmatprep.subr.bf16.mxu0 0
  %259 = vmatpush2.bf16.msra.mxu0 0
  %260 = vmatprep.subr.bf16.mxu0 0
  %261 = vmatpush2.bf16.msra.mxu0 0
  %262 = vmatprep.subr.bf16.mxu0 0
  %263 = vmatpush2.bf16.msra.mxu0 0
  %264 = vmatprep.subr.bf16.mxu0 0
  %265 = vmatpush2.bf16.msra.mxu0 0
  %266 = vmatprep.mubr.bf16.mxu0 0
  %267 = vmatmul.mubr.bf16.gmra.mxu0 %v232
  %v268 = vpop.f32.mrf.mxu0
  %v269 = vadd.f32 0.0, %v268
  %v270 = vpop.f32.mrf.mxu0
  %v271 = vpop.f32.mrf.mxu0
  %v272 = vpop.f32.mrf.mxu0
  %273 = vdwg.mxu0
  %275 = vrot.lane.b32.xlu0 %v205, 32
  %v276 = vpop.permute.xlu0 %275
  %v281 = vunpack.c.l.b16 %v210
  %v282 = vunpack.c.l.b16 %v211
  %v283 = vunpack.c.l.b16 %v212
  %v284 = vunpack.c.l.b16 %v213
  %v285 = vpack.c.b16 %v282, %v281
  %v286 = vpack.c.b16 %v284, %v283
  %v290 = vsel %vm60, %v276, 0
  %292 = vmatprep.subr.bf16.mxu0 0
  %293 = vmatpush1.bf16.msra.mxu0 0
  %294 = vmatprep.subr.bf16.mxu0 0
  %295 = vmatpush1.bf16.msra.mxu0 0
  %296 = vmatprep.subr.bf16.mxu0 0
  %297 = vmatpush1.bf16.msra.mxu0 0
  %298 = vmatprep.subr.bf16.mxu0 0
  %299 = vmatpush1.bf16.msra.mxu0 0
  %300 = vmatprep.subr.bf16.mxu0 0
  %301 = vmatpush1.bf16.msra.mxu0 0
  %302 = vmatprep.subr.bf16.mxu0 0
  %303 = vmatpush1.bf16.msra.mxu0 0
  %304 = vmatprep.subr.bf16.mxu0 0
  %305 = vmatpush1.bf16.msra.mxu0 %v286
  %306 = vmatprep.subr.bf16.mxu0 0
  %307 = vmatpush1.bf16.msra.mxu0 %v285
  %308 = vmatprep.subr.bf16.mxu0 0
  %309 = vmatpush2.bf16.msra.mxu0 0
  %310 = vmatprep.subr.bf16.mxu0 0
  %311 = vmatpush2.bf16.msra.mxu0 0
  %312 = vmatprep.subr.bf16.mxu0 0
  %313 = vmatpush2.bf16.msra.mxu0 0
  %314 = vmatprep.subr.bf16.mxu0 0
  %315 = vmatpush2.bf16.msra.mxu0 0
  %316 = vmatprep.subr.bf16.mxu0 0
  %317 = vmatpush2.bf16.msra.mxu0 0
  %318 = vmatprep.subr.bf16.mxu0 0
  %319 = vmatpush2.bf16.msra.mxu0 0
  %320 = vmatprep.subr.bf16.mxu0 0
  %321 = vmatpush2.bf16.msra.mxu0 0
  %322 = vmatprep.subr.bf16.mxu0 0
  %323 = vmatpush2.bf16.msra.mxu0 0
  %324 = vmatprep.mubr.bf16.mxu0 0
  %325 = vmatmul.mubr.bf16.gmra.mxu0 %v290
  %v326 = vpop.f32.mrf.mxu0
  %v327 = vadd.f32 %v269, %v326
  %v328 = vpop.f32.mrf.mxu0
  %v329 = vpop.f32.mrf.mxu0
  %v330 = vpop.f32.mrf.mxu0
  %331 = vdwg.mxu0
  %v332 = vld [vmem:[%s8] sm:$0x1]
  %v334 = vlaneseq
  %v335 = vshrl.u32 %v334, 7
  %v336 = vsub.s32 0, %v335
  %v337 = vrot.slane %v332, %v336
  %v339 = vadd.f32 %v327, %v337
  %v340 = vxor.u32 %v339, 2147483648
  %v341 = vmul.f32 %v340, 1.442695
  %v342 = vpow.pop %v341
  %v343 = vadd.f32 %v342, 1.0
  %v344 = vrcp.pop %v343
  %v345 = vmul.f32 1.0, %v344
  %v346 = vtanh.pop %v339
  %348 = vrot.lane.b32.xlu0 %v209, 32
  %v349 = vpop.permute.xlu0 %348
  %v351 = vmul.f32 %v345, %v349
  %353 = vrot.lane.b32.xlu0 %v346, 64
  %v354 = vpop.permute.xlu0 %353
  %v356 = vmul.f32 %v345, %v354
  %358 = vrot.lane.b32.xlu0 %v356, 32
  %v359 = vpop.permute.xlu0 %358
  %v361 = vadd.f32 %v351, %v359
  %v362 = vtanh.pop %v361
  %364 = vrot.lane.b32.xlu0 %v362, 64
  %v365 = vpop.permute.xlu0 %364
  %v367 = vmul.f32 %v345, %v365
  %369 = vrot.lane.b32.xlu0 %v367, 32
  %v370 = vpop.permute.xlu0 %369
  %s372 = scalar_lea.vmem %s9, 8
  %373 = vst.msk [vmem:[%s372] sm:$0xff] %vm60, %v370
  %375 = vrot.lane.b32.xlu0 %v361, 96
  %v376 = vpop.permute.xlu0 %375
  %s378 = scalar_lea.vmem %s10, 8
  %379 = vst.msk [vmem:[%s378] sm:$0xff] %vm60, %v376
  // Predicated region
  $region38: #{multilayer_lstm_cell_forward.1} parent=0 // pred_check
    _
  $region39: #{multilayer_lstm_cell_forward.1} parent=0 // pred_check_branch
    %381 = sbr.rel (0) target = $region41
  $region40: #{multilayer_lstm_cell_forward.1} parent=0 // pred_region
    _
  $region41: #{multilayer_lstm_cell_forward.1} parent=0 // pred_fallthru
    _
  // Predicated region
  $region42: #{multilayer_lstm_cell_forward.1} parent=0 // pred_check
    _
  $region43: #{multilayer_lstm_cell_forward.1} parent=0 // pred_check_branch
    %383 = sbr.rel (0) target = $region45
  $region44: #{multilayer_lstm_cell_forward.1} parent=0 // pred_region
    _
  $region45: #{multilayer_lstm_cell_forward.1} parent=0 // pred_fallthru
    _
  // Predicated region
  $region46: #{multilayer_lstm_cell_forward.1} parent=0 // pred_check
    _
  $region47: #{multilayer_lstm_cell_forward.1} parent=0 // pred_check_branch
    %385 = sbr.rel (0) target = $region49
  $region48: #{multilayer_lstm_cell_forward.1} parent=0 // pred_region
    _
  $region49: #{multilayer_lstm_cell_forward.1} parent=0 // pred_fallthru
    _
  // Predicated region
  $region50: #{multilayer_lstm_cell_forward.1} parent=0 // pred_check
    _
  $region51: #{multilayer_lstm_cell_forward.1} parent=0 // pred_check_branch
    %387 = sbr.rel (0) target = $region53
  $region52: #{multilayer_lstm_cell_forward.1} parent=0 // pred_region
    _
  $region53: #{multilayer_lstm_cell_forward.1} parent=0 // pred_fallthru
    _

</llo_original>
